<compile_context>
chip_gen: v7x
topology: tpu7x:2x2x1
jax: 0.10.0
libtpu: 0.0.40
codegen_flags: <defaults>
</compile_context>

<pallas_src>
import numpy as np
import jax
import jax.numpy as jnp
from jax.experimental import pallas as pl
from jax.experimental.pallas import tpu as pltpu

N_BATCH = 2
L_IN = 25
C_IN = 12

# (cin, cout, stride, lin, lout) for encode_conv1..4
_CONV_CFG = [
    (12, 4, 1, 25, 25),
    (4, 4, 2, 25, 13),
    (4, 8, 1, 13, 13),
    (8, 8, 2, 13, 7),
]
_NCLASS = 25
_NCLASS_PAD = 128      # lane-dense output / fc3 padding
_NEG_FILL = -1e30      # padded logits -> exp() == 0 in the softmax


def _leaky(x):
    # F.leaky_relu default negative_slope = 0.01
    return jnp.where(x >= 0, x, 0.01 * x)


def _forward_kernel(x_ref, cw_ref, cb_ref, fc1w_ref, fc1b_ref, fc3w_ref, fc3b_ref,
                    out_ref, pad1_ref, pad2_ref, pad3_ref):
    nb = N_BATCH
    pads = (pad1_ref, pad2_ref, pad3_ref)
    # Zero the padded-activation scratch buffers once (only the two boundary
    # rows really need it; a single full store is simpler and just as cheap).
    for pd in pads:
        pd[...] = jnp.zeros(pd.shape, pd.dtype)

    src = x_ref            # padded activations of the current layer: (lin+2, nb*cin)
    row = 0                # running row offset into the packed conv-weight slab
    h = None
    for li, (cin, cout, stride, _lin, lout) in enumerate(_CONV_CFG):
        kdim = 3 * nb * cin
        w = cw_ref[row:row + kdim, 0:nb * cout]          # (3*nb*cin, nb*cout) bf16
        b = cb_ref[li:li + 1, 0:nb * cout]               # (1, nb*cout) f32
        row += kdim
        if stride == 1:
            taps = [src[k:k + lout, :] for k in range(3)]
        else:  # stride 2: sublane-strided reads of the zero-padded scratch
            taps = [src[pl.ds(k, lout, stride=2), :] for k in range(3)]
        g = jnp.concatenate(taps, axis=1).astype(jnp.bfloat16)              # (lout, 3*nb*cin)
        h = _leaky(jnp.dot(g, w, preferred_element_type=jnp.float32) + b)   # (lout, nb*cout) f32
        if li + 1 < len(_CONV_CFG):
            dst = pads[li]
            dst[1:1 + lout, :] = h
            src = dst

    # h: (7, nb*8).  Flatten channel-major (torch .view order is baked into fc1w).
    flat = jnp.concatenate(
        [jnp.concatenate([h[t:t + 1, n * 8:(n + 1) * 8] for t in range(7)], axis=1)
         for n in range(nb)], axis=0).astype(jnp.bfloat16)                  # (nb, 56)

    z = _leaky(jnp.dot(flat, fc1w_ref[...], preferred_element_type=jnp.float32)
               + fc1b_ref[...])                                             # (nb, 200) f32
    logits = jnp.dot(z.astype(jnp.bfloat16), fc3w_ref[...],
                     preferred_element_type=jnp.float32) + fc3b_ref[...]    # (nb, 128) f32

    m = jnp.max(logits, axis=1, keepdims=True)
    e = jnp.exp(logits - m)                    # padded lanes: exp(-1e30 - m) == 0
    p = e * pl.reciprocal(jnp.sum(e, axis=1, keepdims=True), approx=True)
    out_ref[...] = p.astype(out_ref.dtype)


def prepare_params(params, nb=N_BATCH):
    """One-time, host-side parameter packing (hoisted out of the per-call path)."""
    wrows = []
    brows = np.zeros((len(_CONV_CFG), nb * 8), np.float32)
    for li, (cin, cout, _stride, _lin, _lout) in enumerate(_CONV_CFG):
        w = np.asarray(params[f"conv{li + 1}_w"], np.float32)   # torch layout (cout, cin, 3)
        b = np.asarray(params[f"conv{li + 1}_b"], np.float32)   # (cout,)
        wt = np.transpose(w, (2, 1, 0))                         # (3, cin, cout)
        big = np.zeros((3 * nb * cin, nb * 8), np.float32)      # block-diagonal over the batch
        for k in range(3):
            for n in range(nb):
                r0 = k * nb * cin + n * cin
                big[r0:r0 + cin, n * cout:(n + 1) * cout] = wt[k]
        wrows.append(big)
        brows[li, :nb * cout] = np.tile(b, nb)
    cw = jnp.asarray(np.concatenate(wrows, axis=0), jnp.bfloat16)   # (168, 16)
    cb = jnp.asarray(brows)                                          # (4, 16) f32

    # fc1: torch flatten index f = c*7 + t  ->  rows ordered (t, c) to match the kernel.
    fc1w = np.transpose(np.asarray(params["fc1_w"], np.float32).reshape(200, 8, 7),
                        (2, 1, 0)).reshape(56, 200)
    fc1b = np.asarray(params["fc1_b"], np.float32).reshape(1, 200)
    # fc3 padded to 128 lanes: zero weight columns, -1e30 bias -> softmax pad lanes == 0.
    fc3w = np.zeros((200, _NCLASS_PAD), np.float32)
    fc3w[:, :_NCLASS] = np.asarray(params["fc3_w"], np.float32).T
    fc3b = np.full((1, _NCLASS_PAD), _NEG_FILL, np.float32)
    fc3b[0, :_NCLASS] = np.asarray(params["fc3_b"], np.float32)

    return {
        "cw": cw, "cb": cb,
        "fc1w": jnp.asarray(fc1w, jnp.bfloat16), "fc1b": jnp.asarray(fc1b),
        "fc3w": jnp.asarray(fc3w, jnp.bfloat16), "fc3b": jnp.asarray(fc3b),
    }


@jax.jit
def model_forward_pallas(x_nchw, prep):
    assert x_nchw.shape == (N_BATCH, C_IN, L_IN)
    nb = N_BATCH
    # NCW -> (L, N*C) channels-last with the batch folded into lanes, zero-padded rows.
    x = jnp.transpose(x_nchw.astype(jnp.float32), (2, 0, 1)).reshape(L_IN, nb * C_IN)
    xp = jnp.pad(x, ((1, 1), (0, 0)))                               # (27, 24)

    out = pl.pallas_call(
        _forward_kernel,
        out_shape=jax.ShapeDtypeStruct((nb, _NCLASS_PAD), jnp.float32),
        scratch_shapes=[
            pltpu.VMEM((27, nb * 4), jnp.float32),   # padded conv1 output
            pltpu.VMEM((15, nb * 4), jnp.float32),   # padded conv2 output
            pltpu.VMEM((15, nb * 8), jnp.float32),   # padded conv3 output
        ],
    )(xp, prep["cw"], prep["cb"], prep["fc1w"], prep["fc1b"], prep["fc3w"], prep["fc3b"])
    return out[:, :_NCLASS]


# ----------------------- pure-JAX reference (PyTorch semantics) -----------------------
def model_forward_ref(x_nchw, params):
    x = x_nchw.astype(jnp.float32)

    def conv(h, w, b, stride):
        y = jax.lax.conv_general_dilated(
            h, w, window_strides=(stride,), padding=[(1, 1)],
            dimension_numbers=("NCH", "OIH", "NCH"),
            precision=jax.lax.Precision.HIGHEST)
        return y + b[None, :, None]

    h = _leaky(conv(x, params["conv1_w"], params["conv1_b"], 1))
    h = _leaky(conv(h, params["conv2_w"], params["conv2_b"], 2))
    h = _leaky(conv(h, params["conv3_w"], params["conv3_b"], 1))
    h = _leaky(conv(h, params["conv4_w"], params["conv4_b"], 2))
    h = h.reshape(h.shape[0], -1)                                 # (N, 56), channel-major like torch .view
    h = _leaky(jnp.dot(h, params["fc1_w"].T, precision=jax.lax.Precision.HIGHEST) + params["fc1_b"])
    logits = jnp.dot(h, params["fc3_w"].T, precision=jax.lax.Precision.HIGHEST) + params["fc3_b"]
    return jax.nn.softmax(logits, axis=1)


def init_params(key):
    keys = jax.random.split(key, 12)

    def u(k, shape, fan_in):
        bound = 1.0 / np.sqrt(fan_in)
        return jax.random.uniform(k, shape, jnp.float32, -bound, bound)

    return {
        "conv1_w": u(keys[0], (4, 12, 3), 12 * 3), "conv1_b": u(keys[1], (4,), 12 * 3),
        "conv2_w": u(keys[2], (4, 4, 3), 4 * 3),   "conv2_b": u(keys[3], (4,), 4 * 3),
        "conv3_w": u(keys[4], (8, 4, 3), 4 * 3),   "conv3_b": u(keys[5], (8,), 4 * 3),
        "conv4_w": u(keys[6], (8, 8, 3), 8 * 3),   "conv4_b": u(keys[7], (8,), 8 * 3),
        "fc1_w":  u(keys[8], (200, 56), 56),       "fc1_b":  u(keys[9], (200,), 56),
        "fc3_w":  u(keys[10], (25, 200), 200),     "fc3_b":  u(keys[11], (25,), 200),
    }


if __name__ == "__main__":
    key = jax.random.PRNGKey(0)
    pkey, xkey = jax.random.split(key)
    params = init_params(pkey)
    prep = prepare_params(params)          # one-time parameter packing (cached)

    # Input matches PyTorch NCW: (batch=2, channels=12, length=25)
    x = jax.random.normal(xkey, (N_BATCH, C_IN, L_IN), jnp.float32)

    out = model_forward_pallas(x, prep)
    out = jax.block_until_ready(out)

    ref = model_forward_ref(x, params)
    assert out.shape == (N_BATCH, 25)
    if not np.allclose(np.asarray(out), np.asarray(ref), atol=2e-3, rtol=1e-2):
        raise AssertionError("Pallas kernel output mismatches reference")
    print("KERNEL_OK")
</pallas_src>

<mosaic_0001>
module attributes {stable_mosaic.version = 11 : i64} {
  func.func @_forward_kernel(%arg0: memref<27x24xf32, #tpu.memory_space<vmem>>, %arg1: memref<168x16xbf16, #tpu.memory_space<vmem>>, %arg2: memref<4x16xf32, #tpu.memory_space<vmem>>, %arg3: memref<56x200xbf16, #tpu.memory_space<vmem>>, %arg4: memref<1x200xf32, #tpu.memory_space<vmem>>, %arg5: memref<200x128xbf16, #tpu.memory_space<vmem>>, %arg6: memref<1x128xf32, #tpu.memory_space<vmem>>, %arg7: memref<2x128xf32, #tpu.memory_space<vmem>>, %arg8: memref<27x8xf32, #tpu.memory_space<vmem>>, %arg9: memref<15x8xf32, #tpu.memory_space<vmem>>, %arg10: memref<15x16xf32, #tpu.memory_space<vmem>>) attributes {dimension_semantics = [], scalar_prefetch = 0 : i64, scratch_operands = 3 : i64, tpu.core_type = #tpu.core_type<tc>} {
    %cst = arith.constant 0.000000e+00 : f32
    %0 = vector.broadcast %cst : f32 to vector<27x8xf32>
    %c0 = arith.constant 0 : index
    %c0_0 = arith.constant 0 : index
    %1 = vector.load %arg8[%c0, %c0_0] : memref<27x8xf32, #tpu.memory_space<vmem>>, vector<27x8xf32>
    tpu.vector_store %arg8[%c0, %c0_0], %0 {strides = array<i32>} : memref<27x8xf32, #tpu.memory_space<vmem>>, vector<27x8xf32>,
    %cst_1 = arith.constant 0.000000e+00 : f32
    %2 = vector.broadcast %cst_1 : f32 to vector<15x8xf32>
    %c0_2 = arith.constant 0 : index
    %c0_3 = arith.constant 0 : index
    %3 = vector.load %arg9[%c0_2, %c0_3] : memref<15x8xf32, #tpu.memory_space<vmem>>, vector<15x8xf32>
    tpu.vector_store %arg9[%c0_2, %c0_3], %2 {strides = array<i32>} : memref<15x8xf32, #tpu.memory_space<vmem>>, vector<15x8xf32>,
    %cst_4 = arith.constant 0.000000e+00 : f32
    %4 = vector.broadcast %cst_4 : f32 to vector<15x16xf32>
    %c0_5 = arith.constant 0 : index
    %c0_6 = arith.constant 0 : index
    %5 = vector.load %arg10[%c0_5, %c0_6] : memref<15x16xf32, #tpu.memory_space<vmem>>, vector<15x16xf32>
    tpu.vector_store %arg10[%c0_5, %c0_6], %4 {strides = array<i32>} : memref<15x16xf32, #tpu.memory_space<vmem>>, vector<15x16xf32>,
    %c0_7 = arith.constant 0 : index
    %c0_8 = arith.constant 0 : index
    %6 = vector.load %arg1[%c0_7, %c0_8] : memref<168x16xbf16, #tpu.memory_space<vmem>>, vector<72x8xbf16>
    %c0_9 = arith.constant 0 : index
    %c0_10 = arith.constant 0 : index
    %7 = vector.load %arg2[%c0_9, %c0_10] : memref<4x16xf32, #tpu.memory_space<vmem>>, vector<1x8xf32>
    %c0_11 = arith.constant 0 : index
    %c0_12 = arith.constant 0 : index
    %8 = vector.load %arg0[%c0_11, %c0_12] : memref<27x24xf32, #tpu.memory_space<vmem>>, vector<25x24xf32>
    %c1 = arith.constant 1 : index
    %c0_13 = arith.constant 0 : index
    %9 = vector.load %arg0[%c1, %c0_13] : memref<27x24xf32, #tpu.memory_space<vmem>>, vector<25x24xf32>
    %c2 = arith.constant 2 : index
    %c0_14 = arith.constant 0 : index
    %10 = vector.load %arg0[%c2, %c0_14] : memref<27x24xf32, #tpu.memory_space<vmem>>, vector<25x24xf32>
    %11 = tpu.concatenate %8, %9, %10 in 1 : vector<25x24xf32>, vector<25x24xf32>, vector<25x24xf32> -> vector<25x72xf32>
    %12 = arith.truncf %11 : vector<25x72xf32> to vector<25x72xbf16>
    %cst_15 = arith.constant dense<0.000000e+00> : vector<25x8xf32>
    %13 = tpu.matmul %12, %6, %cst_15 {dimension_numbers = #tpu.dot_dimension_numbers<[1], [0], [0], [1], [0, 0, 1, 1], [], []>} : vector<25x72xbf16>, vector<72x8xbf16>, vector<25x8xf32> -> vector<25x8xf32>
    %14 = vector.broadcast %7 : vector<1x8xf32> to vector<25x8xf32>
    %15 = arith.addf %13, %14 : vector<25x8xf32>
    %cst_16 = arith.constant 0.000000e+00 : f32
    %16 = vector.broadcast %cst_16 : f32 to vector<25x8xf32>
    %17 = arith.cmpf oge, %15, %16 : vector<25x8xf32>
    %cst_17 = arith.constant 0.00999999977 : f32
    %18 = vector.broadcast %cst_17 : f32 to vector<25x8xf32>
    %19 = arith.mulf %18, %15 : vector<25x8xf32>
    %20 = arith.select %17, %15, %19 : vector<25x8xi1>, vector<25x8xf32>
    %c1_18 = arith.constant 1 : index
    %c0_19 = arith.constant 0 : index
    %21 = vector.load %arg8[%c1_18, %c0_19] : memref<27x8xf32, #tpu.memory_space<vmem>>, vector<25x8xf32>
    tpu.vector_store %arg8[%c1_18, %c0_19], %20 {strides = array<i32>} : memref<27x8xf32, #tpu.memory_space<vmem>>, vector<25x8xf32>,
    %c72 = arith.constant 72 : index
    %c0_20 = arith.constant 0 : index
    %22 = vector.load %arg1[%c72, %c0_20] : memref<168x16xbf16, #tpu.memory_space<vmem>>, vector<24x8xbf16>
    %c1_21 = arith.constant 1 : index
    %c0_22 = arith.constant 0 : index
    %23 = vector.load %arg2[%c1_21, %c0_22] : memref<4x16xf32, #tpu.memory_space<vmem>>, vector<1x8xf32>
    %c0_23 = arith.constant 0 : index
    %c0_24 = arith.constant 0 : index
    %24 = tpu.strided_load %arg8[%c0_23, %c0_24] {strides = array<i32: 2, 1>} : memref<27x8xf32, #tpu.memory_space<vmem>>, vector<13x8xf32>
    %c1_25 = arith.constant 1 : index
    %c0_26 = arith.constant 0 : index
    %25 = tpu.strided_load %arg8[%c1_25, %c0_26] {strides = array<i32: 2, 1>} : memref<27x8xf32, #tpu.memory_space<vmem>>, vector<13x8xf32>
    %c2_27 = arith.constant 2 : index
    %c0_28 = arith.constant 0 : index
    %26 = tpu.strided_load %arg8[%c2_27, %c0_28] {strides = array<i32: 2, 1>} : memref<27x8xf32, #tpu.memory_space<vmem>>, vector<13x8xf32>
    %27 = tpu.concatenate %24, %25, %26 in 1 : vector<13x8xf32>, vector<13x8xf32>, vector<13x8xf32> -> vector<13x24xf32>
    %28 = arith.truncf %27 : vector<13x24xf32> to vector<13x24xbf16>
    %cst_29 = arith.constant dense<0.000000e+00> : vector<13x8xf32>
    %29 = tpu.matmul %28, %22, %cst_29 {dimension_numbers = #tpu.dot_dimension_numbers<[1], [0], [0], [1], [0, 0, 1, 1], [], []>} : vector<13x24xbf16>, vector<24x8xbf16>, vector<13x8xf32> -> vector<13x8xf32>
    %30 = vector.broadcast %23 : vector<1x8xf32> to vector<13x8xf32>
    %31 = arith.addf %29, %30 : vector<13x8xf32>
    %cst_30 = arith.constant 0.000000e+00 : f32
    %32 = vector.broadcast %cst_30 : f32 to vector<13x8xf32>
    %33 = arith.cmpf oge, %31, %32 : vector<13x8xf32>
    %cst_31 = arith.constant 0.00999999977 : f32
    %34 = vector.broadcast %cst_31 : f32 to vector<13x8xf32>
    %35 = arith.mulf %34, %31 : vector<13x8xf32>
    %36 = arith.select %33, %31, %35 : vector<13x8xi1>, vector<13x8xf32>
    %c1_32 = arith.constant 1 : index
    %c0_33 = arith.constant 0 : index
    %37 = vector.load %arg9[%c1_32, %c0_33] : memref<15x8xf32, #tpu.memory_space<vmem>>, vector<13x8xf32>
    tpu.vector_store %arg9[%c1_32, %c0_33], %36 {strides = array<i32>} : memref<15x8xf32, #tpu.memory_space<vmem>>, vector<13x8xf32>,
    %c96 = arith.constant 96 : index
    %c0_34 = arith.constant 0 : index
    %38 = vector.load %arg1[%c96, %c0_34] : memref<168x16xbf16, #tpu.memory_space<vmem>>, vector<24x16xbf16>
    %c2_35 = arith.constant 2 : index
    %c0_36 = arith.constant 0 : index
    %39 = vector.load %arg2[%c2_35, %c0_36] : memref<4x16xf32, #tpu.memory_space<vmem>>, vector<1x16xf32>
    %c0_37 = arith.constant 0 : index
    %c0_38 = arith.constant 0 : index
    %40 = vector.load %arg9[%c0_37, %c0_38] : memref<15x8xf32, #tpu.memory_space<vmem>>, vector<13x8xf32>
    %c1_39 = arith.constant 1 : index
    %c0_40 = arith.constant 0 : index
    %41 = vector.load %arg9[%c1_39, %c0_40] : memref<15x8xf32, #tpu.memory_space<vmem>>, vector<13x8xf32>
    %c2_41 = arith.constant 2 : index
    %c0_42 = arith.constant 0 : index
    %42 = vector.load %arg9[%c2_41, %c0_42] : memref<15x8xf32, #tpu.memory_space<vmem>>, vector<13x8xf32>
    %43 = tpu.concatenate %40, %41, %42 in 1 : vector<13x8xf32>, vector<13x8xf32>, vector<13x8xf32> -> vector<13x24xf32>
    %44 = arith.truncf %43 : vector<13x24xf32> to vector<13x24xbf16>
    %cst_43 = arith.constant dense<0.000000e+00> : vector<13x16xf32>
    %45 = tpu.matmul %44, %38, %cst_43 {dimension_numbers = #tpu.dot_dimension_numbers<[1], [0], [0], [1], [0, 0, 1, 1], [], []>} : vector<13x24xbf16>, vector<24x16xbf16>, vector<13x16xf32> -> vector<13x16xf32>
    %46 = vector.broadcast %39 : vector<1x16xf32> to vector<13x16xf32>
    %47 = arith.addf %45, %46 : vector<13x16xf32>
    %cst_44 = arith.constant 0.000000e+00 : f32
    %48 = vector.broadcast %cst_44 : f32 to vector<13x16xf32>
    %49 = arith.cmpf oge, %47, %48 : vector<13x16xf32>
    %cst_45 = arith.constant 0.00999999977 : f32
    %50 = vector.broadcast %cst_45 : f32 to vector<13x16xf32>
    %51 = arith.mulf %50, %47 : vector<13x16xf32>
    %52 = arith.select %49, %47, %51 : vector<13x16xi1>, vector<13x16xf32>
    %c1_46 = arith.constant 1 : index
    %c0_47 = arith.constant 0 : index
    %53 = vector.load %arg10[%c1_46, %c0_47] : memref<15x16xf32, #tpu.memory_space<vmem>>, vector<13x16xf32>
    tpu.vector_store %arg10[%c1_46, %c0_47], %52 {strides = array<i32>} : memref<15x16xf32, #tpu.memory_space<vmem>>, vector<13x16xf32>,
    %c120 = arith.constant 120 : index
    %c0_48 = arith.constant 0 : index
    %54 = vector.load %arg1[%c120, %c0_48] : memref<168x16xbf16, #tpu.memory_space<vmem>>, vector<48x16xbf16>
    %c3 = arith.constant 3 : index
    %c0_49 = arith.constant 0 : index
    %55 = vector.load %arg2[%c3, %c0_49] : memref<4x16xf32, #tpu.memory_space<vmem>>, vector<1x16xf32>
    %c0_50 = arith.constant 0 : index
    %c0_51 = arith.constant 0 : index
    %56 = tpu.strided_load %arg10[%c0_50, %c0_51] {strides = array<i32: 2, 1>} : memref<15x16xf32, #tpu.memory_space<vmem>>, vector<7x16xf32>
    %c1_52 = arith.constant 1 : index
    %c0_53 = arith.constant 0 : index
    %57 = tpu.strided_load %arg10[%c1_52, %c0_53] {strides = array<i32: 2, 1>} : memref<15x16xf32, #tpu.memory_space<vmem>>, vector<7x16xf32>
    %c2_54 = arith.constant 2 : index
    %c0_55 = arith.constant 0 : index
    %58 = tpu.strided_load %arg10[%c2_54, %c0_55] {strides = array<i32: 2, 1>} : memref<15x16xf32, #tpu.memory_space<vmem>>, vector<7x16xf32>
    %59 = tpu.concatenate %56, %57, %58 in 1 : vector<7x16xf32>, vector<7x16xf32>, vector<7x16xf32> -> vector<7x48xf32>
    %60 = arith.truncf %59 : vector<7x48xf32> to vector<7x48xbf16>
    %cst_56 = arith.constant dense<0.000000e+00> : vector<7x16xf32>
    %61 = tpu.matmul %60, %54, %cst_56 {dimension_numbers = #tpu.dot_dimension_numbers<[1], [0], [0], [1], [0, 0, 1, 1], [], []>} : vector<7x48xbf16>, vector<48x16xbf16>, vector<7x16xf32> -> vector<7x16xf32>
    %62 = vector.broadcast %55 : vector<1x16xf32> to vector<7x16xf32>
    %63 = arith.addf %61, %62 : vector<7x16xf32>
    %cst_57 = arith.constant 0.000000e+00 : f32
    %64 = vector.broadcast %cst_57 : f32 to vector<7x16xf32>
    %65 = arith.cmpf oge, %63, %64 : vector<7x16xf32>
    %cst_58 = arith.constant 0.00999999977 : f32
    %66 = vector.broadcast %cst_58 : f32 to vector<7x16xf32>
    %67 = arith.mulf %66, %63 : vector<7x16xf32>
    %68 = arith.select %65, %63, %67 : vector<7x16xi1>, vector<7x16xf32>
    %69 = vector.extract_strided_slice %68 {offsets = [0, 0], sizes = [1, 8], strides = [1, 1]} : vector<7x16xf32> to vector<1x8xf32>
    %70 = vector.extract_strided_slice %68 {offsets = [1, 0], sizes = [1, 8], strides = [1, 1]} : vector<7x16xf32> to vector<1x8xf32>
    %71 = vector.extract_strided_slice %68 {offsets = [2, 0], sizes = [1, 8], strides = [1, 1]} : vector<7x16xf32> to vector<1x8xf32>
    %72 = vector.extract_strided_slice %68 {offsets = [3, 0], sizes = [1, 8], strides = [1, 1]} : vector<7x16xf32> to vector<1x8xf32>
    %73 = vector.extract_strided_slice %68 {offsets = [4, 0], sizes = [1, 8], strides = [1, 1]} : vector<7x16xf32> to vector<1x8xf32>
    %74 = vector.extract_strided_slice %68 {offsets = [5, 0], sizes = [1, 8], strides = [1, 1]} : vector<7x16xf32> to vector<1x8xf32>
    %75 = vector.extract_strided_slice %68 {offsets = [6, 0], sizes = [1, 8], strides = [1, 1]} : vector<7x16xf32> to vector<1x8xf32>
    %76 = tpu.concatenate %69, %70, %71, %72, %73, %74, %75 in 1 : vector<1x8xf32>, vector<1x8xf32>, vector<1x8xf32>, vector<1x8xf32>, vector<1x8xf32>, vector<1x8xf32>, vector<1x8xf32> -> vector<1x56xf32>
    %77 = vector.extract_strided_slice %68 {offsets = [0, 8], sizes = [1, 8], strides = [1, 1]} : vector<7x16xf32> to vector<1x8xf32>
    %78 = vector.extract_strided_slice %68 {offsets = [1, 8], sizes = [1, 8], strides = [1, 1]} : vector<7x16xf32> to vector<1x8xf32>
    %79 = vector.extract_strided_slice %68 {offsets = [2, 8], sizes = [1, 8], strides = [1, 1]} : vector<7x16xf32> to vector<1x8xf32>
    %80 = vector.extract_strided_slice %68 {offsets = [3, 8], sizes = [1, 8], strides = [1, 1]} : vector<7x16xf32> to vector<1x8xf32>
    %81 = vector.extract_strided_slice %68 {offsets = [4, 8], sizes = [1, 8], strides = [1, 1]} : vector<7x16xf32> to vector<1x8xf32>
    %82 = vector.extract_strided_slice %68 {offsets = [5, 8], sizes = [1, 8], strides = [1, 1]} : vector<7x16xf32> to vector<1x8xf32>
    %83 = vector.extract_strided_slice %68 {offsets = [6, 8], sizes = [1, 8], strides = [1, 1]} : vector<7x16xf32> to vector<1x8xf32>
    %84 = tpu.concatenate %77, %78, %79, %80, %81, %82, %83 in 1 : vector<1x8xf32>, vector<1x8xf32>, vector<1x8xf32>, vector<1x8xf32>, vector<1x8xf32>, vector<1x8xf32>, vector<1x8xf32> -> vector<1x56xf32>
    %85 = tpu.concatenate %76, %84 in 0 : vector<1x56xf32>, vector<1x56xf32> -> vector<2x56xf32>
    %86 = arith.truncf %85 : vector<2x56xf32> to vector<2x56xbf16>
    %c0_59 = arith.constant 0 : index
    %c0_60 = arith.constant 0 : index
    %87 = vector.load %arg3[%c0_59, %c0_60] : memref<56x200xbf16, #tpu.memory_space<vmem>>, vector<56x200xbf16>
    %cst_61 = arith.constant dense<0.000000e+00> : vector<2x200xf32>
    %88 = tpu.matmul %86, %87, %cst_61 {dimension_numbers = #tpu.dot_dimension_numbers<[1], [0], [0], [1], [0, 0, 1, 1], [], []>} : vector<2x56xbf16>, vector<56x200xbf16>, vector<2x200xf32> -> vector<2x200xf32>
    %c0_62 = arith.constant 0 : index
    %c0_63 = arith.constant 0 : index
    %89 = vector.load %arg4[%c0_62, %c0_63] : memref<1x200xf32, #tpu.memory_space<vmem>>, vector<1x200xf32>
    %90 = vector.broadcast %89 : vector<1x200xf32> to vector<2x200xf32>
    %91 = arith.addf %88, %90 : vector<2x200xf32>
    %cst_64 = arith.constant 0.000000e+00 : f32
    %92 = vector.broadcast %cst_64 : f32 to vector<2x200xf32>
    %93 = arith.cmpf oge, %91, %92 : vector<2x200xf32>
    %cst_65 = arith.constant 0.00999999977 : f32
    %94 = vector.broadcast %cst_65 : f32 to vector<2x200xf32>
    %95 = arith.mulf %94, %91 : vector<2x200xf32>
    %96 = arith.select %93, %91, %95 : vector<2x200xi1>, vector<2x200xf32>
    %97 = arith.truncf %96 : vector<2x200xf32> to vector<2x200xbf16>
    %c0_66 = arith.constant 0 : index
    %c0_67 = arith.constant 0 : index
    %98 = vector.load %arg5[%c0_66, %c0_67] : memref<200x128xbf16, #tpu.memory_space<vmem>>, vector<200x128xbf16>
    %cst_68 = arith.constant dense<0.000000e+00> : vector<2x128xf32>
    %99 = tpu.matmul %97, %98, %cst_68 {dimension_numbers = #tpu.dot_dimension_numbers<[1], [0], [0], [1], [0, 0, 1, 1], [], []>} : vector<2x200xbf16>, vector<200x128xbf16>, vector<2x128xf32> -> vector<2x128xf32>
    %c0_69 = arith.constant 0 : index
    %c0_70 = arith.constant 0 : index
    %100 = vector.load %arg6[%c0_69, %c0_70] : memref<1x128xf32, #tpu.memory_space<vmem>>, vector<1x128xf32>
    %101 = vector.broadcast %100 : vector<1x128xf32> to vector<2x128xf32>
    %102 = arith.addf %99, %101 : vector<2x128xf32>
    %cst_71 = arith.constant dense<0xFF800000> : vector<2xf32>
    %103 = vector.multi_reduction <maximumf>, %102, %cst_71 [1] : vector<2x128xf32> to vector<2xf32>
    %104 = vector.shape_cast %103 : vector<2xf32> to vector<2x1xf32>
    %105 = vector.broadcast %104 : vector<2x1xf32> to vector<2x128xf32>
    %106 = arith.subf %102, %105 : vector<2x128xf32>
    %107 = math.exp %106 : vector<2x128xf32>
    %cst_72 = arith.constant dense<0.000000e+00> : vector<2xf32>
    %108 = vector.multi_reduction <add>, %107, %cst_72 [1] : vector<2x128xf32> to vector<2xf32>
    %109 = vector.shape_cast %108 : vector<2xf32> to vector<2x1xf32>
    %110 = tpu.reciprocal %109 {approx = true} : vector<2x1xf32> -> vector<2x1xf32>
    %111 = vector.broadcast %110 : vector<2x1xf32> to vector<2x128xf32>
    %112 = arith.mulf %107, %111 : vector<2x128xf32>
    %c0_73 = arith.constant 0 : index
    %c0_74 = arith.constant 0 : index
    %113 = vector.load %arg7[%c0_73, %c0_74] : memref<2x128xf32, #tpu.memory_space<vmem>>, vector<2x128xf32>
    tpu.vector_store %arg7[%c0_73, %c0_74], %112 {strides = array<i32>} : memref<2x128xf32, #tpu.memory_space<vmem>>, vector<2x128xf32>,
    return
  }
}

</mosaic_0001>

<llo_original>
// kernel: model_forward_pallas.1
$region0: #{model_forward_pallas.1}
  #allocation0 [shape = 'u32[]', space=smem, size = 0x4, offset = 0x4, fixed_abs, tag = 'smem constant byte address 0x4 - core index']
  #allocation1 [shape = 'u32[144,128]{1,0:T(1,128)}', space=vmem, size = 0x12000, scoped, tag = 'internal scratch']
  #allocation2 [shape = 'f32[27,8]{1,0:T(8,128)}', space=vmem, size = 0x4000, scoped, tag = 'scratch operand']
  #allocation3 [shape = 'f32[15,8]{1,0:T(8,128)}', space=vmem, size = 0x2000, scoped, tag = 'scratch operand']
  #allocation4 [shape = 'f32[15,16]{1,0:T(8,128)}', space=vmem, size = 0x2000, scoped, tag = 'scratch operand']
  %s0 = inlined_call_operand.vmem [shape: f32[27,24], index: 0, kind: input, shape index: {}]
  %s1 = inlined_call_operand.vmem [shape: bf16[168,16], index: 1, kind: input, shape index: {}]
  %s2 = inlined_call_operand.vmem [shape: f32[4,16], index: 2, kind: input, shape index: {}]
  %s3 = inlined_call_operand.vmem [shape: bf16[56,200], index: 3, kind: input, shape index: {}]
  %s4 = inlined_call_operand.vmem [shape: f32[1,200], index: 4, kind: input, shape index: {}]
  %s5 = inlined_call_operand.vmem [shape: bf16[200,128], index: 5, kind: input, shape index: {}]
  %s6 = inlined_call_operand.vmem [shape: f32[1,128], index: 6, kind: input, shape index: {}]
  %s7 = inlined_call_operand.hbm [shape: f32[2,128], index: 7, kind: output, shape index: {}]
  %s8 = sld [smem:[#allocation0]]
  $region38: #{model_forward_pallas.1} parent=0
    _
  %s10 = ssub.s32 1, %s8
  %s11 = scalar_select 0, %s10, %s8
  $region1: #{model_forward_pallas.1} parent=0
    #allocation5 [shape = 'u8[1024]{0}', space=vmem, size = 0x400, scoped, tag = 'output window, operand 0, single buffered']
    #allocation6 [shape = 's32[1]{0}', space=sflag, size = 0x4, scoped, tag = 'scoped memory for model_forward_pallas.1']
    %12 = vsyncpa [#allocation6], 0
    // Predicated region
    $region2: #{model_forward_pallas.1} parent=1 // pred_check
      _
    $region3: #{model_forward_pallas.1} parent=1 // pred_check_branch
      %14 = sbr.rel (0) target = $region5
    $region4: #{model_forward_pallas.1} parent=1 // pred_region
      _
    $region5: #{model_forward_pallas.1} parent=1 // pred_fallthru
      _
    // Predicated region
    $region6: #{model_forward_pallas.1} parent=1 // pred_check
      _
    $region7: #{model_forward_pallas.1} parent=1 // pred_check_branch
      %16 = sbr.rel (0) target = $region9
    $region8: #{model_forward_pallas.1} parent=1 // pred_region
      _
    $region9: #{model_forward_pallas.1} parent=1 // pred_fallthru
      _
    // Predicated region
    $region10: #{model_forward_pallas.1} parent=1 // pred_check
      _
    $region11: #{model_forward_pallas.1} parent=1 // pred_check_branch
      %18 = sbr.rel (0) target = $region13
    $region12: #{model_forward_pallas.1} parent=1 // pred_region
      _
    $region13: #{model_forward_pallas.1} parent=1 // pred_fallthru
      _
    // Predicated region
    $region14: #{model_forward_pallas.1} parent=1 // pred_check
      _
    $region15: #{model_forward_pallas.1} parent=1 // pred_check_branch
      %20 = sbr.rel (0) target = $region17
    $region16: #{model_forward_pallas.1} parent=1 // pred_region
      _
    $region17: #{model_forward_pallas.1} parent=1 // pred_fallthru
      _
    // Predicated region
    $region18: #{model_forward_pallas.1} parent=1 // pred_check
      _
    $region19: #{model_forward_pallas.1} parent=1 // pred_check_branch
      %22 = sbr.rel (0) target = $region21
    $region20: #{model_forward_pallas.1} parent=1 // pred_region
      _
    $region21: #{model_forward_pallas.1} parent=1 // pred_fallthru
      _
    // Predicated region
    $region22: #{model_forward_pallas.1} parent=1 // pred_check
      _
    $region23: #{model_forward_pallas.1} parent=1 // pred_check_branch
      %24 = sbr.rel (0) target = $region25
    $region24: #{model_forward_pallas.1} parent=1 // pred_region
      _
    $region25: #{model_forward_pallas.1} parent=1 // pred_fallthru
      _
    // Predicated region
    $region26: #{model_forward_pallas.1} parent=1 // pred_check
      _
    $region27: #{model_forward_pallas.1} parent=1 // pred_check_branch
      %26 = sbr.rel (0) target = $region29
    $region28: #{model_forward_pallas.1} parent=1 // pred_region
      _
    $region29: #{model_forward_pallas.1} parent=1 // pred_fallthru
      _
    %vm28 = vcmask 64512
    %29 = vst.msk [vmem:[#allocation2] sm:$0xff] %vm28, 0.0
    %30 = vst.msk [vmem:[#allocation2 + $0x8] sm:$0xff] %vm28, 0.0
    %31 = vst.msk [vmem:[#allocation2 + $0x10] sm:$0xff] %vm28, 0.0
    %vm32 = vcmask 59392
    %33 = vst.msk [vmem:[#allocation2 + $0x18] sm:$0x7] %vm32, 0.0
    %34 = vst.msk [vmem:[#allocation3] sm:$0xff] %vm28, 0.0
    %vm35 = vcmask 63488
    %36 = vst.msk [vmem:[#allocation3 + $0x8] sm:$0x7f] %vm35, 0.0
    %vm37 = vcmask 130048
    %38 = vst.msk [vmem:[#allocation4] sm:$0xff] %vm37, 0.0
    %vm39 = vcmask 129024
    %40 = vst.msk [vmem:[#allocation4 + $0x8] sm:$0x7f] %vm39, 0.0
    %v41 = vld [vmem:[%s1] sm:$0xf]
    %v42 = vld [vmem:[%s1 + $0x4] sm:$0xf]
    %v43 = vld [vmem:[%s1 + $0x8] sm:$0xf]
    %v44 = vld [vmem:[%s1 + $0xc] sm:$0xf]
    %v45 = vld [vmem:[%s1 + $0x10] sm:$0xf]
    %v46 = vld [vmem:[%s1 + $0x14] sm:$0xf]
    %v47 = vld [vmem:[%s1 + $0x18] sm:$0xf]
    %v48 = vld [vmem:[%s1 + $0x1c] sm:$0xf]
    %v49 = vld [vmem:[%s1 + $0x20] sm:$0xf]
    %v50 = vld [vmem:[%s2] sm:$0x1]
    %v51 = vld [vmem:[%s0] sm:$0xff]
    %v52 = vld [vmem:[%s0 + $0x8] sm:$0xff]
    %v53 = vld [vmem:[%s0 + $0x10] sm:$0xff]
    %v54 = vld [vmem:[%s0 + $0x18] sm:$0x1]
    %v55 = vld [vmem:[%s0 + $0x1] sm:$0xff]
    %v56 = vld [vmem:[%s0 + $0x9] sm:$0xff]
    %v57 = vld [vmem:[%s0 + $0x11] sm:$0xff]
    %v58 = vld [vmem:[%s0 + $0x19] sm:$0x1]
    %v59 = vld [vmem:[%s0 + $0x2] sm:$0xff]
    %v60 = vld [vmem:[%s0 + $0xa] sm:$0xff]
    %v61 = vld [vmem:[%s0 + $0x12] sm:$0xff]
    %v62 = vld [vmem:[%s0 + $0x1a] sm:$0x1]
    %67 = vrot.lane.b32.xlu0 %v55, 24
    %v68 = vpop.permute.xlu0 %67
    %69 = vrot.lane.b32.xlu0 %v56, 24
    %v70 = vpop.permute.xlu0 %69
    %71 = vrot.lane.b32.xlu0 %v57, 24
    %v72 = vpop.permute.xlu0 %71
    %73 = vrot.lane.b32.xlu0 %v58, 24
    %v74 = vpop.permute.xlu0 %73
    %83 = vrot.lane.b32.xlu0 %v59, 48
    %v84 = vpop.permute.xlu0 %83
    %85 = vrot.lane.b32.xlu0 %v60, 48
    %v86 = vpop.permute.xlu0 %85
    %87 = vrot.lane.b32.xlu0 %v61, 48
    %v88 = vpop.permute.xlu0 %87
    %89 = vrot.lane.b32.xlu0 %v62, 48
    %v90 = vpop.permute.xlu0 %89
    %vm95 = vcmask 195584
    %v96 = vsel %vm95, %v51, %v68
    %v97 = vsel %vm95, %v52, %v70
    %v98 = vsel %vm95, %v53, %v72
    %v99 = vsel %vm95, %v54, %v74
    %vm100 = vcmask 392192
    %v101 = vsel %vm100, %v96, %v84
    %v102 = vsel %vm100, %v97, %v86
    %v103 = vsel %vm100, %v98, %v88
    %v104 = vsel %vm100, %v99, %v90
    %v105 = vpack.c.bf16 %v102, %v101
    %v106 = vpack.c.bf16 %v104, %v103
    %v107 = vlaneseq
    %v108 = vshrl.u32 %v107, 7
    %v109 = vsub.s32 0, %v108
    %v110 = vrot.slane %v50, %v109
    %v120 = vunpack.c.l.b16 %v41
    %v121 = vunpack.c.l.b16 %v42
    %v122 = vunpack.c.l.b16 %v43
    %v123 = vunpack.c.l.b16 %v44
    %v124 = vunpack.c.l.b16 %v45
    %v125 = vunpack.c.l.b16 %v46
    %v126 = vunpack.c.l.b16 %v47
    %v127 = vunpack.c.l.b16 %v48
    %v128 = vunpack.c.l.b16 %v49
    %v129 = vpack.c.b16 %v121, %v120
    %v130 = vpack.c.b16 %v123, %v122
    %v131 = vpack.c.b16 %v125, %v124
    %v132 = vpack.c.b16 %v127, %v126
    %v133 = vpack.c.b16 %v128, %v128
    %vm138 = vcmask 588800
    %v140 = vsel %vm138, %v105, 0
    %v143 = vsel %vm138, %v106, 0
    %vm145 = vcmask 1043456
    %v147 = vsel %vm145, %v133, 0
    %149 = vmatprep.subr.bf16.mxu0 0
    %150 = vmatpush1.bf16.msra.mxu0 %v129
    %151 = vmatprep.subr.bf16.mxu0 0
    %152 = vmatpush1.bf16.msra.mxu0 %v130
    %153 = vmatprep.subr.bf16.mxu0 0
    %154 = vmatpush1.bf16.msra.mxu0 %v131
    %155 = vmatprep.subr.bf16.mxu0 0
    %156 = vmatpush1.bf16.msra.mxu0 %v132
    %157 = vmatprep.subr.bf16.mxu0 0
    %158 = vmatpush1.bf16.msra.mxu0 %v147
    %159 = vmatprep.subr.bf16.mxu0 0
    %160 = vmatpush1.bf16.msra.mxu0 0
    %161 = vmatprep.subr.bf16.mxu0 0
    %162 = vmatpush1.bf16.msra.mxu0 0
    %163 = vmatprep.subr.bf16.mxu0 0
    %164 = vmatpush1.bf16.msra.mxu0 0
    %165 = vmatprep.subr.bf16.mxu0 0
    %166 = vmatpush1.bf16.msra.mxu0 0
    %167 = vmatprep.subr.bf16.mxu0 0
    %168 = vmatpush1.bf16.msra.mxu0 0
    %169 = vmatprep.subr.bf16.mxu0 0
    %170 = vmatpush1.bf16.msra.mxu0 0
    %171 = vmatprep.subr.bf16.mxu0 0
    %172 = vmatpush1.bf16.msra.mxu0 0
    %173 = vmatprep.subr.bf16.mxu0 0
    %174 = vmatpush1.bf16.msra.mxu0 0
    %175 = vmatprep.subr.bf16.mxu0 0
    %176 = vmatpush1.bf16.msra.mxu0 0
    %177 = vmatprep.subr.bf16.mxu0 0
    %178 = vmatpush1.bf16.msra.mxu0 0
    %179 = vmatprep.subr.bf16.mxu0 0
    %180 = vmatpush1.bf16.msra.mxu0 0
    %181 = vmatprep.mubr.bf16.mxu0 0
    %182 = vmatmul.mubr.bf16.gmra.mrb[0].mxu0 %v140
    %v183 = vpop.f32.mrb[0].mxu0
    %v184 = vadd.f32 %v110, %v183
    %v185 = vpop.f32.mrb[0].mxu0
    %v186 = vpop.f32.mrb[0].mxu0
    %v187 = vadd.f32 %v110, %v186
    %v188 = vpop.f32.mrb[0].mxu0
    %189 = vmatprep.mubr.bf16.mxu0 0
    %190 = vmatmul.mubr.bf16.gmra.mrb[0].mxu0 %v143
    %v191 = vpop.f32.mrb[0].mxu0
    %v192 = vadd.f32 %v110, %v191
    %v193 = vpop.f32.mrb[0].mxu0
    %v194 = vpop.f32.mrb[0].mxu0
    %v195 = vadd.f32 %v110, %v194
    %v196 = vpop.f32.mrb[0].mxu0
    %197 = vdwg.mxu0
    %vm198 = vcmp.ge.f32.partialorder %v184, 0.0
    %vm199 = vcmp.ge.f32.partialorder %v187, 0.0
    %vm200 = vcmp.ge.f32.partialorder %v192, 0.0
    %vm201 = vcmp.ge.f32.partialorder %v195, 0.0
    %v202 = vmul.f32 %v184, 0.01
    %v203 = vmul.f32 %v187, 0.01
    %v204 = vmul.f32 %v192, 0.01
    %v205 = vmul.f32 %v195, 0.01
    %v206 = vsel %vm198, %v184, %v202
    %v207 = vsel %vm199, %v187, %v203
    %v208 = vsel %vm200, %v192, %v204
    %v209 = vsel %vm201, %v195, %v205
    %210 = vst.msk [vmem:[#allocation2 + $0x1] sm:$0xff] %vm28, %v206
    %211 = vst.msk [vmem:[#allocation2 + $0x9] sm:$0xff] %vm28, %v207
    %212 = vst.msk [vmem:[#allocation2 + $0x11] sm:$0xff] %vm28, %v208
    %vm213 = vcmask 57344
    %214 = vst.msk [vmem:[#allocation2 + $0x19] sm:$0x1] %vm213, %v209
    %v215 = vld [vmem:[%s1 + $0x24] sm:$0xf]
    %v216 = vld [vmem:[%s1 + $0x28] sm:$0xf]
    %v217 = vld [vmem:[%s1 + $0x2c] sm:$0xf]
    %v218 = vld [vmem:[%s2 + $0x1] sm:$0x1]
    %v219 = vld [vmem:[#allocation2] ss:$2 sm:$0xff]
    %s220 = scalar_lea.vmem [#allocation2], 16
    %v221 = vld [vmem:[%s220] ss:$2 sm:$0x1f]
    %s222 = scalar_lea.vmem [#allocation2], 1
    %v223 = vld [vmem:[%s222] ss:$2 sm:$0xff]
    %s224 = scalar_lea.vmem [#allocation2], 17
    %v225 = vld [vmem:[%s224] ss:$2 sm:$0x1f]
    %s226 = scalar_lea.vmem [#allocation2], 2
    %v227 = vld [vmem:[%s226] ss:$2 sm:$0xff]
    %s228 = scalar_lea.vmem [#allocation2], 18
    %v229 = vld [vmem:[%s228] ss:$2 sm:$0x1f]
    %232 = vrot.lane.b32.xlu0 %v223, 8
    %v233 = vpop.permute.xlu0 %232
    %234 = vrot.lane.b32.xlu0 %v225, 8
    %v235 = vpop.permute.xlu0 %234
    %240 = vrot.lane.b32.xlu0 %v227, 16
    %v241 = vpop.permute.xlu0 %240
    %242 = vrot.lane.b32.xlu0 %v229, 16
    %v243 = vpop.permute.xlu0 %242
    %v246 = vsel %vm28, %v219, %v233
    %v247 = vsel %vm28, %v221, %v235
    %v248 = vsel %vm37, %v246, %v241
    %v249 = vsel %vm37, %v247, %v243
    %v250 = vpack.c.bf16 %v249, %v248
    %v251 = vlaneseq
    %v252 = vshrl.u32 %v251, 7
    %v253 = vsub.s32 0, %v252
    %v254 = vrot.slane %v218, %v253
    %v258 = vunpack.c.l.b16 %v215
    %v259 = vunpack.c.l.b16 %v216
    %v260 = vunpack.c.l.b16 %v217
    %v261 = vpack.c.b16 %v259, %v258
    %v262 = vpack.c.b16 %v260, %v260
    %v265 = vsel %vm95, %v250, 0
    %v268 = vsel %vm145, %v262, 0
    %270 = vmatprep.subr.bf16.mxu0 0
    %271 = vmatpush1.bf16.msra.mxu0 %v261
    %272 = vmatprep.subr.bf16.mxu0 0
    %273 = vmatpush1.bf16.msra.mxu0 %v268
    %274 = vmatprep.subr.bf16.mxu0 0
    %275 = vmatpush1.bf16.msra.mxu0 0
    %276 = vmatprep.subr.bf16.mxu0 0
    %277 = vmatpush1.bf16.msra.mxu0 0
    %278 = vmatprep.subr.bf16.mxu0 0
    %279 = vmatpush1.bf16.msra.mxu0 0
    %280 = vmatprep.subr.bf16.mxu0 0
    %281 = vmatpush1.bf16.msra.mxu0 0
    %282 = vmatprep.subr.bf16.mxu0 0
    %283 = vmatpush1.bf16.msra.mxu0 0
    %284 = vmatprep.subr.bf16.mxu0 0
    %285 = vmatpush1.bf16.msra.mxu0 0
    %286 = vmatprep.subr.bf16.mxu0 0
    %287 = vmatpush1.bf16.msra.mxu0 0
    %288 = vmatprep.subr.bf16.mxu0 0
    %289 = vmatpush1.bf16.msra.mxu0 0
    %290 = vmatprep.subr.bf16.mxu0 0
    %291 = vmatpush1.bf16.msra.mxu0 0
    %292 = vmatprep.subr.bf16.mxu0 0
    %293 = vmatpush1.bf16.msra.mxu0 0
    %294 = vmatprep.subr.bf16.mxu0 0
    %295 = vmatpush1.bf16.msra.mxu0 0
    %296 = vmatprep.subr.bf16.mxu0 0
    %297 = vmatpush1.bf16.msra.mxu0 0
    %298 = vmatprep.subr.bf16.mxu0 0
    %299 = vmatpush1.bf16.msra.mxu0 0
    %300 = vmatprep.subr.bf16.mxu0 0
    %301 = vmatpush1.bf16.msra.mxu0 0
    %302 = vmatprep.mubr.bf16.mxu0 0
    %303 = vmatmul.mubr.bf16.gmra.mrb[0].mxu0 %v265
    %v304 = vpop.f32.mrb[0].mxu0
    %v305 = vadd.f32 %v254, %v304
    %v306 = vpop.f32.mrb[0].mxu0
    %v307 = vpop.f32.mrb[0].mxu0
    %v308 = vadd.f32 %v254, %v307
    %v309 = vpop.f32.mrb[0].mxu0
    %310 = vdwg.mxu0
    %vm311 = vcmp.ge.f32.partialorder %v305, 0.0
    %vm312 = vcmp.ge.f32.partialorder %v308, 0.0
    %v313 = vmul.f32 %v305, 0.01
    %v314 = vmul.f32 %v308, 0.01
    %v315 = vsel %vm311, %v305, %v313
    %v316 = vsel %vm312, %v308, %v314
    %317 = vst.msk [vmem:[#allocation3 + $0x1] sm:$0xff] %vm28, %v315
    %vm318 = vcmask 61440
    %319 = vst.msk [vmem:[#allocation3 + $0x9] sm:$0x1f] %vm318, %v316
    %v320 = vld [vmem:[%s1 + $0x30] sm:$0xf]
    %v321 = vld [vmem:[%s1 + $0x34] sm:$0xf]
    %v322 = vld [vmem:[%s1 + $0x38] sm:$0xf]
    %v323 = vld [vmem:[%s2 + $0x2] sm:$0x1]
    %v324 = vld [vmem:[#allocation3] sm:$0xff]
    %v325 = vld [vmem:[#allocation3 + $0x8] sm:$0x1f]
    %v326 = vld [vmem:[#allocation3 + $0x1] sm:$0xff]
    %v327 = vld [vmem:[#allocation3 + $0x9] sm:$0x1f]
    %v328 = vld [vmem:[#allocation3 + $0x2] sm:$0xff]
    %v329 = vld [vmem:[#allocation3 + $0xa] sm:$0x1f]
    %332 = vrot.lane.b32.xlu0 %v326, 8
    %v333 = vpop.permute.xlu0 %332
    %334 = vrot.lane.b32.xlu0 %v327, 8
    %v335 = vpop.permute.xlu0 %334
    %340 = vrot.lane.b32.xlu0 %v328, 16
    %v341 = vpop.permute.xlu0 %340
    %342 = vrot.lane.b32.xlu0 %v329, 16
    %v343 = vpop.permute.xlu0 %342
    %v346 = vsel %vm28, %v324, %v333
    %v347 = vsel %vm28, %v325, %v335
    %v348 = vsel %vm37, %v346, %v341
    %v349 = vsel %vm37, %v347, %v343
    %v350 = vpack.c.bf16 %v349, %v348
    %v351 = vlaneseq
    %v352 = vshrl.u32 %v351, 7
    %v353 = vsub.s32 0, %v352
    %v354 = vrot.slane %v323, %v353
    %v358 = vunpack.c.l.b16 %v320
    %v359 = vunpack.c.l.b16 %v321
    %v360 = vunpack.c.l.b16 %v322
    %v361 = vpack.c.b16 %v359, %v358
    %v362 = vpack.c.b16 %v360, %v360
    %v365 = vsel %vm95, %v350, 0
    %v368 = vsel %vm145, %v362, 0
    %370 = vmatprep.subr.bf16.mxu0 0
    %371 = vmatpush1.bf16.msra.mxu0 %v361
    %372 = vmatprep.subr.bf16.mxu0 0
    %373 = vmatpush1.bf16.msra.mxu0 %v368
    %374 = vmatprep.subr.bf16.mxu0 0
    %375 = vmatpush1.bf16.msra.mxu0 0
    %376 = vmatprep.subr.bf16.mxu0 0
    %377 = vmatpush1.bf16.msra.mxu0 0
    %378 = vmatprep.subr.bf16.mxu0 0
    %379 = vmatpush1.bf16.msra.mxu0 0
    %380 = vmatprep.subr.bf16.mxu0 0
    %381 = vmatpush1.bf16.msra.mxu0 0
    %382 = vmatprep.subr.bf16.mxu0 0
    %383 = vmatpush1.bf16.msra.mxu0 0
    %384 = vmatprep.subr.bf16.mxu0 0
    %385 = vmatpush1.bf16.msra.mxu0 0
    %386 = vmatprep.subr.bf16.mxu0 0
    %387 = vmatpush1.bf16.msra.mxu0 0
    %388 = vmatprep.subr.bf16.mxu0 0
    %389 = vmatpush1.bf16.msra.mxu0 0
    %390 = vmatprep.subr.bf16.mxu0 0
    %391 = vmatpush1.bf16.msra.mxu0 0
    %392 = vmatprep.subr.bf16.mxu0 0
    %393 = vmatpush1.bf16.msra.mxu0 0
    %394 = vmatprep.subr.bf16.mxu0 0
    %395 = vmatpush1.bf16.msra.mxu0 0
    %396 = vmatprep.subr.bf16.mxu0 0
    %397 = vmatpush1.bf16.msra.mxu0 0
    %398 = vmatprep.subr.bf16.mxu0 0
    %399 = vmatpush1.bf16.msra.mxu0 0
    %400 = vmatprep.subr.bf16.mxu0 0
    %401 = vmatpush1.bf16.msra.mxu0 0
    %402 = vmatprep.mubr.bf16.mxu0 0
    %403 = vmatmul.mubr.bf16.gmra.mrb[0].mxu0 %v365
    %v404 = vpop.f32.mrb[0].mxu0
    %v405 = vadd.f32 %v354, %v404
    %v406 = vpop.f32.mrb[0].mxu0
    %v407 = vpop.f32.mrb[0].mxu0
    %v408 = vadd.f32 %v354, %v407
    %v409 = vpop.f32.mrb[0].mxu0
    %410 = vdwg.mxu0
    %vm411 = vcmp.ge.f32.partialorder %v405, 0.0
    %vm412 = vcmp.ge.f32.partialorder %v408, 0.0
    %v413 = vmul.f32 %v405, 0.01
    %v414 = vmul.f32 %v408, 0.01
    %v415 = vsel %vm411, %v405, %v413
    %v416 = vsel %vm412, %v408, %v414
    %417 = vst.msk [vmem:[#allocation4 + $0x1] sm:$0xff] %vm37, %v415
    %vm418 = vcmask 126976
    %419 = vst.msk [vmem:[#allocation4 + $0x9] sm:$0x1f] %vm418, %v416
    %v420 = vld [vmem:[%s1 + $0x3c] sm:$0xf]
    %v421 = vld [vmem:[%s1 + $0x40] sm:$0xf]
    %v422 = vld [vmem:[%s1 + $0x44] sm:$0xf]
    %v423 = vld [vmem:[%s1 + $0x48] sm:$0xf]
    %v424 = vld [vmem:[%s1 + $0x4c] sm:$0xf]
    %v425 = vld [vmem:[%s1 + $0x50] sm:$0xf]
    %v426 = vld [vmem:[%s2 + $0x3] sm:$0x1]
    %v427 = vld [vmem:[#allocation4] ss:$2 sm:$0x7f]
    %s428 = scalar_lea.vmem [#allocation4], 1
    %v429 = vld [vmem:[%s428] ss:$2 sm:$0x7f]
    %s430 = scalar_lea.vmem [#allocation4], 2
    %v431 = vld [vmem:[%s430] ss:$2 sm:$0x7f]
    %433 = vrot.lane.b32.xlu0 %v429, 16
    %v434 = vpop.permute.xlu0 %433
    %437 = vrot.lane.b32.xlu0 %v431, 32
    %v438 = vpop.permute.xlu0 %437
    %v440 = vsel %vm37, %v427, %v434
    %vm441 = vcmask 261120
    %v442 = vsel %vm441, %v440, %v438
    %v443 = vpack.c.bf16 %v442, %v442
    %v444 = vlaneseq
    %v445 = vshrl.u32 %v444, 7
    %v446 = vsub.s32 0, %v445
    %v447 = vrot.slane %v426, %v446
    %v454 = vunpack.c.l.b16 %v420
    %v455 = vunpack.c.l.b16 %v421
    %v456 = vunpack.c.l.b16 %v422
    %v457 = vunpack.c.l.b16 %v423
    %v458 = vunpack.c.l.b16 %v424
    %v459 = vunpack.c.l.b16 %v425
    %v460 = vpack.c.b16 %v455, %v454
    %v461 = vpack.c.b16 %v457, %v456
    %v462 = vpack.c.b16 %v459, %v458
    %v467 = vsel %vm100, %v443, 0
    %469 = vmatprep.subr.bf16.mxu0 0
    %470 = vmatpush1.bf16.msra.mxu0 %v460
    %471 = vmatprep.subr.bf16.mxu0 0
    %472 = vmatpush1.bf16.msra.mxu0 %v461
    %473 = vmatprep.subr.bf16.mxu0 0
    %474 = vmatpush1.bf16.msra.mxu0 %v462
    %475 = vmatprep.subr.bf16.mxu0 0
    %476 = vmatpush1.bf16.msra.mxu0 0
    %477 = vmatprep.subr.bf16.mxu0 0
    %478 = vmatpush1.bf16.msra.mxu0 0
    %479 = vmatprep.subr.bf16.mxu0 0
    %480 = vmatpush1.bf16.msra.mxu0 0
    %481 = vmatprep.subr.bf16.mxu0 0
    %482 = vmatpush1.bf16.msra.mxu0 0
    %483 = vmatprep.subr.bf16.mxu0 0
    %484 = vmatpush1.bf16.msra.mxu0 0
    %485 = vmatprep.subr.bf16.mxu0 0
    %486 = vmatpush1.bf16.msra.mxu0 0
    %487 = vmatprep.subr.bf16.mxu0 0
    %488 = vmatpush1.bf16.msra.mxu0 0
    %489 = vmatprep.subr.bf16.mxu0 0
    %490 = vmatpush1.bf16.msra.mxu0 0
    %491 = vmatprep.subr.bf16.mxu0 0
    %492 = vmatpush1.bf16.msra.mxu0 0
    %493 = vmatprep.subr.bf16.mxu0 0
    %494 = vmatpush1.bf16.msra.mxu0 0
    %495 = vmatprep.subr.bf16.mxu0 0
    %496 = vmatpush1.bf16.msra.mxu0 0
    %497 = vmatprep.subr.bf16.mxu0 0
    %498 = vmatpush1.bf16.msra.mxu0 0
    %499 = vmatprep.subr.bf16.mxu0 0
    %500 = vmatpush1.bf16.msra.mxu0 0
    %501 = vmatprep.mubr.bf16.mxu0 0
    %502 = vmatmul.mubr.bf16.gmra.mrb[0].mxu0 %v467
    %v503 = vpop.f32.mrb[0].mxu0
    %v504 = vadd.f32 %v447, %v503
    %v505 = vpop.f32.mrb[0].mxu0
    %v506 = vpop.f32.mrb[0].mxu0
    %v507 = vpop.f32.mrb[0].mxu0
    %508 = vdwg.mxu0
    %vm509 = vcmp.ge.f32.partialorder %v504, 0.0
    %v510 = vmul.f32 %v504, 0.01
    %v511 = vsel %vm509, %v504, %v510
    %v513 = vrot.slane %v511, 1
    %514 = vrot.lane.b32.xlu0 %v513, 8
    %v515 = vpop.permute.xlu0 %514
    %v517 = vrot.slane %v511, 2
    %518 = vrot.lane.b32.xlu0 %v517, 16
    %v519 = vpop.permute.xlu0 %518
    %v521 = vrot.slane %v511, 3
    %522 = vrot.lane.b32.xlu0 %v521, 24
    %v523 = vpop.permute.xlu0 %522
    %v525 = vrot.slane %v511, 4
    %526 = vrot.lane.b32.xlu0 %v525, 32
    %v527 = vpop.permute.xlu0 %526
    %v529 = vrot.slane %v511, 5
    %530 = vrot.lane.b32.xlu0 %v529, 40
    %v531 = vpop.permute.xlu0 %530
    %v533 = vrot.slane %v511, 6
    %534 = vrot.lane.b32.xlu0 %v533, 48
    %v535 = vpop.permute.xlu0 %534
    %v537 = vsel %vm28, %v511, %v515
    %v538 = vsel %vm37, %v537, %v519
    %v539 = vsel %vm95, %v538, %v523
    %v540 = vsel %vm441, %v539, %v527
    %vm541 = vcmask 326656
    %v542 = vsel %vm541, %v540, %v531
    %v543 = vsel %vm100, %v542, %v535
    %544 = vrot.lane.b32.xlu0 %v511, 120
    %v545 = vpop.permute.xlu0 %544
    %548 = vrot.lane.b32.xlu0 %v517, 8
    %v549 = vpop.permute.xlu0 %548
    %551 = vrot.lane.b32.xlu0 %v521, 16
    %v552 = vpop.permute.xlu0 %551
    %554 = vrot.lane.b32.xlu0 %v525, 24
    %v555 = vpop.permute.xlu0 %554
    %557 = vrot.lane.b32.xlu0 %v529, 32
    %v558 = vpop.permute.xlu0 %557
    %560 = vrot.lane.b32.xlu0 %v533, 40
    %v561 = vpop.permute.xlu0 %560
    %v563 = vsel %vm28, %v545, %v513
    %v564 = vsel %vm37, %v563, %v549
    %v565 = vsel %vm95, %v564, %v552
    %v566 = vsel %vm441, %v565, %v555
    %v567 = vsel %vm541, %v566, %v558
    %v568 = vsel %vm100, %v567, %v561
    %v570 = vrot.slane %v568, 7
    %vm572 = vcmask 1040384
    %v573 = vsel %vm572, %v543, %v570
    %v574 = vpack.c.bf16 %v573, %v573
    %v575 = vld [vmem:[%s3] sm:$0xff]
    %v576 = vld [vmem:[%s3 + $0x8] sm:$0xff]
    %v577 = vld [vmem:[%s3 + $0x10] sm:$0xff]
    %v578 = vld [vmem:[%s3 + $0x18] sm:$0xff]
    %v579 = vld [vmem:[%s3 + $0x20] sm:$0xff]
    %v580 = vld [vmem:[%s3 + $0x28] sm:$0xff]
    %v581 = vld [vmem:[%s3 + $0x30] sm:$0xff]
    %v582 = vld [vmem:[%s4] sm:$0x3]
    %v584 = vlaneseq
    %v585 = vshrl.u32 %v584, 7
    %v586 = vsub.s32 0, %v585
    %v587 = vrot.slane %v582, %v586
    %v588 = vlaneseq
    %v589 = vshrl.u32 %v588, 7
    %v590 = vsub.s32 1, %v589
    %v591 = vrot.slane %v582, %v590
    %v601 = vunpack.c.l.b16 %v575
    %v602 = vunpack.c.h.b16 %v575
    %v603 = vunpack.c.l.b16 %v576
    %v604 = vunpack.c.h.b16 %v576
    %v605 = vunpack.c.l.b16 %v577
    %v606 = vunpack.c.h.b16 %v577
    %v607 = vunpack.c.l.b16 %v578
    %v608 = vunpack.c.h.b16 %v578
    %v609 = vunpack.c.l.b16 %v579
    %v610 = vunpack.c.h.b16 %v579
    %v611 = vunpack.c.l.b16 %v580
    %v612 = vunpack.c.h.b16 %v580
    %v613 = vunpack.c.l.b16 %v581
    %v614 = vunpack.c.h.b16 %v581
    %v615 = vpack.c.b16 %v603, %v601
    %v616 = vpack.c.b16 %v604, %v602
    %v617 = vpack.c.b16 %v607, %v605
    %v618 = vpack.c.b16 %v608, %v606
    %v619 = vpack.c.b16 %v611, %v609
    %v620 = vpack.c.b16 %v612, %v610
    %v621 = vpack.c.b16 %v613, %v613
    %v622 = vpack.c.b16 %v614, %v614
    %vm629 = vcmask 457728
    %v631 = vsel %vm629, %v574, 0
    %v634 = vsel %vm145, %v621, 0
    %v637 = vsel %vm145, %v622, 0
    %639 = vmatprep.subr.bf16.mxu0 %v616
    %640 = vmatpush1.bf16.msra.mxu0 %v615
    %641 = vmatprep.subr.bf16.mxu0 %v618
    %642 = vmatpush1.bf16.msra.mxu0 %v617
    %643 = vmatprep.subr.bf16.mxu0 %v620
    %644 = vmatpush1.bf16.msra.mxu0 %v619
    %645 = vmatprep.subr.bf16.mxu0 %v637
    %646 = vmatpush1.bf16.msra.mxu0 %v634
    %647 = vmatprep.subr.bf16.mxu0 0
    %648 = vmatpush1.bf16.msra.mxu0 0
    %649 = vmatprep.subr.bf16.mxu0 0
    %650 = vmatpush1.bf16.msra.mxu0 0
    %651 = vmatprep.subr.bf16.mxu0 0
    %652 = vmatpush1.bf16.msra.mxu0 0
    %653 = vmatprep.subr.bf16.mxu0 0
    %654 = vmatpush1.bf16.msra.mxu0 0
    %655 = vmatprep.subr.bf16.mxu0 0
    %656 = vmatpush1.bf16.msra.mxu0 0
    %657 = vmatprep.subr.bf16.mxu0 0
    %658 = vmatpush1.bf16.msra.mxu0 0
    %659 = vmatprep.subr.bf16.mxu0 0
    %660 = vmatpush1.bf16.msra.mxu0 0
    %661 = vmatprep.subr.bf16.mxu0 0
    %662 = vmatpush1.bf16.msra.mxu0 0
    %663 = vmatprep.subr.bf16.mxu0 0
    %664 = vmatpush1.bf16.msra.mxu0 0
    %665 = vmatprep.subr.bf16.mxu0 0
    %666 = vmatpush1.bf16.msra.mxu0 0
    %667 = vmatprep.subr.bf16.mxu0 0
    %668 = vmatpush1.bf16.msra.mxu0 0
    %669 = vmatprep.subr.bf16.mxu0 0
    %670 = vmatpush1.bf16.msra.mxu0 0
    %671 = vmatprep.mubr.bf16.mxu0 0
    %672 = vmatmul.mubr.bf16.gmra.mrb[0].mxu0 %v631
    %v673 = vpop.f32.mrb[0].mxu0
    %v674 = vadd.f32 %v587, %v673
    %v675 = vpop.f32.mrb[0].mxu0
    %v676 = vadd.f32 %v591, %v675
    %v677 = vpop.f32.mrb[0].mxu0
    %v678 = vpop.f32.mrb[0].mxu0
    %679 = vdwg.mxu0
    %vm680 = vcmp.ge.f32.partialorder %v674, 0.0
    %vm681 = vcmp.ge.f32.partialorder %v676, 0.0
    %v682 = vmul.f32 %v674, 0.01
    %v683 = vmul.f32 %v676, 0.01
    %v684 = vsel %vm680, %v674, %v682
    %v685 = vsel %vm681, %v676, %v683
    %v686 = vpack.c.bf16 %v684, %v684
    %v687 = vpack.c.bf16 %v685, %v685
    %v688 = vld [vmem:[%s5] sm:$0xf]
    %v689 = vld [vmem:[%s5 + $0x4] sm:$0xf]
    %v690 = vld [vmem:[%s5 + $0x8] sm:$0xf]
    %v691 = vld [vmem:[%s5 + $0xc] sm:$0xf]
    %v692 = vld [vmem:[%s5 + $0x10] sm:$0xf]
    %v693 = vld [vmem:[%s5 + $0x14] sm:$0xf]
    %v694 = vld [vmem:[%s5 + $0x18] sm:$0xf]
    %v695 = vld [vmem:[%s5 + $0x1c] sm:$0xf]
    %v696 = vld [vmem:[%s5 + $0x20] sm:$0xf]
    %v697 = vld [vmem:[%s5 + $0x24] sm:$0xf]
    %v698 = vld [vmem:[%s5 + $0x28] sm:$0xf]
    %v699 = vld [vmem:[%s5 + $0x2c] sm:$0xf]
    %v700 = vld [vmem:[%s5 + $0x30] sm:$0xf]
    %v701 = vld [vmem:[%s5 + $0x34] sm:$0xf]
    %v702 = vld [vmem:[%s5 + $0x38] sm:$0xf]
    %v703 = vld [vmem:[%s5 + $0x3c] sm:$0xf]
    %v704 = vld [vmem:[%s5 + $0x40] sm:$0xf]
    %v705 = vld [vmem:[%s5 + $0x44] sm:$0xf]
    %v706 = vld [vmem:[%s5 + $0x48] sm:$0xf]
    %v707 = vld [vmem:[%s5 + $0x4c] sm:$0xf]
    %v708 = vld [vmem:[%s5 + $0x50] sm:$0xf]
    %v709 = vld [vmem:[%s5 + $0x54] sm:$0xf]
    %v710 = vld [vmem:[%s5 + $0x58] sm:$0xf]
    %v711 = vld [vmem:[%s5 + $0x5c] sm:$0xf]
    %v712 = vld [vmem:[%s5 + $0x60] sm:$0xf]
    %v713 = vld [vmem:[%s6] sm:$0x1]
    %v715 = vlaneseq
    %v716 = vshrl.u32 %v715, 7
    %v717 = vsub.s32 0, %v716
    %v718 = vrot.slane %v713, %v717
    %v745 = vunpack.c.l.b16 %v688
    %v746 = vunpack.c.l.b16 %v689
    %v747 = vunpack.c.l.b16 %v690
    %v748 = vunpack.c.l.b16 %v691
    %v749 = vunpack.c.l.b16 %v692
    %v750 = vunpack.c.l.b16 %v693
    %v751 = vunpack.c.l.b16 %v694
    %v752 = vunpack.c.l.b16 %v695
    %v753 = vunpack.c.l.b16 %v696
    %v754 = vunpack.c.l.b16 %v697
    %v755 = vunpack.c.l.b16 %v698
    %v756 = vunpack.c.l.b16 %v699
    %v757 = vunpack.c.l.b16 %v700
    %v758 = vunpack.c.l.b16 %v701
    %v759 = vunpack.c.l.b16 %v702
    %v760 = vunpack.c.l.b16 %v703
    %v761 = vunpack.c.l.b16 %v704
    %v762 = vunpack.c.l.b16 %v705
    %v763 = vunpack.c.l.b16 %v706
    %v764 = vunpack.c.l.b16 %v707
    %v765 = vunpack.c.l.b16 %v708
    %v766 = vunpack.c.l.b16 %v709
    %v767 = vunpack.c.l.b16 %v710
    %v768 = vunpack.c.l.b16 %v711
    %v769 = vunpack.c.l.b16 %v712
    %v770 = vpack.c.b16 %v746, %v745
    %v771 = vpack.c.b16 %v748, %v747
    %v772 = vpack.c.b16 %v750, %v749
    %v773 = vpack.c.b16 %v752, %v751
    %v774 = vpack.c.b16 %v754, %v753
    %v775 = vpack.c.b16 %v756, %v755
    %v776 = vpack.c.b16 %v758, %v757
    %v777 = vpack.c.b16 %v760, %v759
    %v778 = vpack.c.b16 %v762, %v761
    %v779 = vpack.c.b16 %v764, %v763
    %v780 = vpack.c.b16 %v766, %v765
    %v781 = vpack.c.b16 %v768, %v767
    %v782 = vpack.c.b16 %v769, %v769
    %v796 = vsel %vm138, %v687, 0
    %v799 = vsel %vm145, %v782, 0
    %801 = vmatprep.subr.bf16.mxu0 0
    %802 = vmatpush1.bf16.msra.mxu0 %v770
    %803 = vmatprep.subr.bf16.mxu0 0
    %804 = vmatpush1.bf16.msra.mxu0 %v771
    %805 = vmatprep.subr.bf16.mxu0 0
    %806 = vmatpush1.bf16.msra.mxu0 %v772
    %807 = vmatprep.subr.bf16.mxu0 0
    %808 = vmatpush1.bf16.msra.mxu0 %v773
    %809 = vmatprep.subr.bf16.mxu0 0
    %810 = vmatpush1.bf16.msra.mxu0 %v774
    %811 = vmatprep.subr.bf16.mxu0 0
    %812 = vmatpush1.bf16.msra.mxu0 %v775
    %813 = vmatprep.subr.bf16.mxu0 0
    %814 = vmatpush1.bf16.msra.mxu0 %v776
    %815 = vmatprep.subr.bf16.mxu0 0
    %816 = vmatpush1.bf16.msra.mxu0 %v777
    %817 = vmatprep.subr.bf16.mxu0 0
    %818 = vmatpush1.bf16.msra.mxu0 %v778
    %819 = vmatprep.subr.bf16.mxu0 0
    %820 = vmatpush1.bf16.msra.mxu0 %v779
    %821 = vmatprep.subr.bf16.mxu0 0
    %822 = vmatpush1.bf16.msra.mxu0 %v780
    %823 = vmatprep.subr.bf16.mxu0 0
    %824 = vmatpush1.bf16.msra.mxu0 %v781
    %825 = vmatprep.subr.bf16.mxu0 0
    %826 = vmatpush1.bf16.msra.mxu0 %v799
    %827 = vmatprep.subr.bf16.mxu0 0
    %828 = vmatpush1.bf16.msra.mxu0 0
    %829 = vmatprep.subr.bf16.mxu0 0
    %830 = vmatpush1.bf16.msra.mxu0 0
    %831 = vmatprep.subr.bf16.mxu0 0
    %832 = vmatpush1.bf16.msra.mxu0 0
    %833 = vmatprep.mubr.bf16.mxu0 %v796
    %834 = vmatmul.mubr.bf16.gmra.mrb[0].mxu0 %v686
    %v835 = vpop.f32.mrb[0].mxu0
    %v836 = vadd.f32 %v718, %v835
    %v837 = vpop.f32.mrb[0].mxu0
    %v838 = vpop.f32.mrb[0].mxu0
    %v839 = vpop.f32.mrb[0].mxu0
    %840 = vdwg.mxu0
    %vm841 = vcmask 1041408
    %v842 = vsel %vm841, %v836, -inf
    %843 = vmax.xlane.f32.xlu0 %v842
    %v844 = vpop.xlane.xlu0 %843
    %v845 = vsub.f32 %v836, %v844
    %v846 = vmul.f32 %v845, 1.442695
    %v847 = vpow.pop %v846
    %v848 = vsel %vm841, %v847, 0.0
    %849 = vadd.xlane.f32.xlu0 %v848
    %v850 = vpop.xlane.xlu0 %849
    %v851 = vrcp.pop %v850
    %v852 = vmul.f32 %v847, %v851
    %853 = vst [vmem:[#allocation5] sm:$0x3] %v852
    // Predicated region
    $region30: #{model_forward_pallas.1} parent=1 // pred_check
      _
    $region31: #{model_forward_pallas.1} parent=1 // pred_check_branch
      %855 = sbr.rel (0) target = $region33
    $region32: #{model_forward_pallas.1} parent=1 // pred_region
      %s857 = ssub.s32 32, 32
      %858 = vsyncadd [#allocation6], %s857
      %s860 = sshll.u32 [#allocation5], 4
      %s861 = int_to_ptr.vmem [resolvable:$true] %s860
      %863 = dma.vmem_to_hbm [thread:$0]  %s861, 32, %s7, [#allocation6]
    $region33: #{model_forward_pallas.1} parent=1 // pred_fallthru
      _
    // Predicated region
    $region34: #{model_forward_pallas.1} parent=1 // pred_check
      _
    $region35: #{model_forward_pallas.1} parent=1 // pred_check_branch
      %865 = sbr.rel (0) target = $region37
    $region36: #{model_forward_pallas.1} parent=1 // pred_region
      %866 = dma.done [#allocation6], 32
    $region37: #{model_forward_pallas.1} parent=1 // pred_fallthru
      _
    %867 = vsyncpa [#allocation6], 1

</llo_original>
